<compile_context>
chip_gen: v7x
topology: tpu7x:2x2x1
jax: 0.10.0
libtpu: 0.0.40
codegen_flags: <defaults>
</compile_context>

<pallas_src>
import jax
import jax.numpy as jnp
from jax import lax
from jax.experimental import pallas as pl
from jax.experimental.pallas import tpu as pltpu


def _verify_kernel(cn_ref, so_ref, w1a_ref, w1b_ref, b1_ref, w2d_ref, b2d_ref,
                   o_ref):
    # cn_ref, so_ref : (TILE_N, H) bf16 row tiles of current_node / step_output
    # w1a_ref, w1b_ref: (H, H) bf16  split halves of verify1.weight.T (resident)
    # b1_ref         : (1, H) f32   verify1.bias
    # w2d_ref        : (1, H) f32   verify2 weight column difference (c0 - c1)
    # b2d_ref        : (1, 1) f32   verify2 bias difference
    # o_ref          : (2, TILE_N) f32  row0 = sigmoid(d) = P(class0),
    #                                   row1 = sigmoid(-d) = P(class1)
    h = jnp.tanh(
        jnp.dot(cn_ref[...], w1a_ref[...], preferred_element_type=jnp.float32)
        + jnp.dot(so_ref[...], w1b_ref[...], preferred_element_type=jnp.float32)
        + b1_ref[...])
    # d = w2d @ h^T -> (1, TILE_N): contraction over H puts the row tile on the
    # lane axis of the result, so the store below is lane-dense / unmasked.
    d = lax.dot_general(w2d_ref[...], h, (((1,), (1,)), ((), ())),
                        preferred_element_type=jnp.float32) + b2d_ref[...]
    o_ref[...] = jax.nn.sigmoid(jnp.concatenate([d, -d], axis=0))


def _round_up(x, m):
    return ((x + m - 1) // m) * m


def _tile_rows(n):
    """Row tile size.

    * multiple of 16 (bf16 sublane packing),
    * at least 2 (balanced) tiles when n allows it, so the "parallel" grid
      axis actually shards across v7x's two TensorCores,
    * capped at 4096 rows so double-buffered, lane-padded bf16 inputs plus the
      f32 intermediates stay comfortably inside scoped VMEM on every
      generation (v5e included, given the raised vmem_limit_bytes).
    """
    cap = 4096
    half = pl.cdiv(n, 2)
    return max(16, min(cap, _round_up(half, 16)))


def prepare_verify_params(params):
    """One-time weight prep, hoisted out of the per-call trace.

    params: (w1 (2H,H), b1 (H,), w2 (H,2), b2 (2,)) — weights already stored
    transposed relative to nn.Linear (i.e. (in, out))."""
    w1, b1, w2, b2 = params
    H = w2.shape[0]
    w1a = w1[:H].astype(jnp.bfloat16)                           # (H, H)
    w1b = w1[H:].astype(jnp.bfloat16)                           # (H, H)
    b1r = b1.reshape(1, H).astype(jnp.float32)                  # (1, H)
    w2d = (w2[:, 0] - w2[:, 1]).reshape(1, H).astype(jnp.float32)  # (1, H)
    b2d = (b2[0] - b2[1]).reshape(1, 1).astype(jnp.float32)        # (1, 1)
    return w1a, w1b, b1r, w2d, b2d


def verify_forward(current_node, step_output, prepared_params):
    """current_node, step_output: (..., H) float32 -> (..., 2) float32 probs."""
    w1a, w1b, b1r, w2d, b2d = prepared_params
    assert current_node.shape == step_output.shape
    lead = current_node.shape[:-1]
    H = current_node.shape[-1]

    # bf16 inputs halve the kernel's HBM read traffic (the op is bandwidth
    # bound at H=32); accumulation inside the kernel stays f32.
    # TODO(synk): in production the producer should emit bf16 directly so this
    # cast fuses away instead of being a separate XLA pass.
    cn = current_node.reshape(-1, H).astype(jnp.bfloat16)
    so = step_output.reshape(-1, H).astype(jnp.bfloat16)
    N = cn.shape[0]

    tile_n = _tile_rows(N)
    num_tiles = pl.cdiv(N, tile_n)  # no wrapper pad: ragged last block is fine
    # (rows are independent; any garbage tail rows are sliced off below).

    row_spec = pl.BlockSpec((tile_n, H), lambda i: (i, 0))

    def res_spec(shape):  # grid-invariant (resident) operand
        return pl.BlockSpec(shape, lambda i: (0,) * len(shape))

    out = pl.pallas_call(
        _verify_kernel,
        out_shape=jax.ShapeDtypeStruct((num_tiles, 2, tile_n), jnp.float32),
        grid=(num_tiles,),
        in_specs=[
            row_spec,                 # current_node rows (bf16)
            row_spec,                 # step_output rows (bf16)
            res_spec((H, H)),         # w1a (bf16, resident)
            res_spec((H, H)),         # w1b (bf16, resident)
            res_spec((1, H)),         # b1
            res_spec((1, H)),         # w2 class-difference row
            res_spec((1, 1)),         # b2 class-difference
        ],
        out_specs=pl.BlockSpec((None, 2, tile_n), lambda i: (i, 0, 0)),
        compiler_params=pltpu.CompilerParams(
            dimension_semantics=("parallel",),
            vmem_limit_bytes=48 * 1024 * 1024),
    )(cn, so, w1a, w1b, b1r, w2d, b2d)

    # (num_tiles, 2, tile_n) -> (rows, 2); drop any ragged-tail rows.
    probs = jnp.transpose(out, (0, 2, 1)).reshape(-1, 2)[:N]
    return probs.reshape(*lead, 2)


def init_verify_params(key, hidden_size):
    """Deterministic synthetic params matching nn.Linear shapes.

    PyTorch nn.Linear(in, out) stores weight (out, in); we store the
    transpose (in, out) for row-major matmul in the kernel.
    """
    k1, k2, k3, k4 = jax.random.split(key, 4)
    bound1 = 1.0 / jnp.sqrt(2.0 * hidden_size)
    bound2 = 1.0 / jnp.sqrt(float(hidden_size))
    w1 = jax.random.uniform(k1, (2 * hidden_size, hidden_size),
                            minval=-bound1, maxval=bound1, dtype=jnp.float32)
    b1 = jax.random.uniform(k2, (hidden_size,),
                            minval=-bound1, maxval=bound1, dtype=jnp.float32)
    w2 = jax.random.uniform(k3, (hidden_size, 2),
                            minval=-bound2, maxval=bound2, dtype=jnp.float32)
    b2 = jax.random.uniform(k4, (2,),
                            minval=-bound2, maxval=bound2, dtype=jnp.float32)
    return w1, b1, w2, b2


def verify_reference(current_node, step_output, params):
    """Pure-JAX f32 reference for correctness check (matches the PyTorch module)."""
    w1, b1, w2, b2 = params
    x = jnp.concatenate([current_node, step_output], axis=-1)
    h = jnp.tanh(x @ w1 + b1)
    logits = h @ w2 + b2
    return jax.nn.softmax(logits, axis=-1)


if __name__ == "__main__":
    B, S, H = 2, 8, 32
    key = jax.random.PRNGKey(0)
    k_cur, k_step, k_par = jax.random.split(key, 3)

    current_node = jax.random.normal(k_cur, (B, S, H), dtype=jnp.float32)
    step_output = jax.random.normal(k_step, (B, S, H), dtype=jnp.float32)
    params = init_verify_params(k_par, H)
    prepared = prepare_verify_params(params)   # one-time weight prep

    out = verify_forward(current_node, step_output, prepared)
    out = jax.block_until_ready(out)

    ref = verify_reference(current_node, step_output, params)
    assert out.shape == (B, S, 2), out.shape
    # Tolerance loosened vs pure-f32 because kernel inputs / W1 are bf16
    # (f32 accumulation inside the kernel).
    assert jnp.allclose(out, ref, atol=1e-2), "mismatch vs reference"
    assert jnp.allclose(jnp.sum(out, axis=-1), 1.0, atol=1e-5), "probs don't sum to 1"

    print("KERNEL_OK")
</pallas_src>

<mosaic_0001>
module attributes {stable_mosaic.version = 11 : i64} {
  func.func @_verify_kernel(%arg0: i32, %arg1: memref<16x32xbf16, #tpu.memory_space<vmem>>, %arg2: memref<16x32xbf16, #tpu.memory_space<vmem>>, %arg3: memref<32x32xbf16, #tpu.memory_space<vmem>>, %arg4: memref<32x32xbf16, #tpu.memory_space<vmem>>, %arg5: memref<1x32xf32, #tpu.memory_space<vmem>>, %arg6: memref<1x32xf32, #tpu.memory_space<vmem>>, %arg7: memref<1x1xf32, #tpu.memory_space<vmem>>, %arg8: memref<1x2x16xf32, #tpu.memory_space<vmem>>) attributes {dimension_semantics = [#tpu.dimension_semantics<parallel>], iteration_bounds = array<i64: 1>, scalar_prefetch = 0 : i64, scratch_operands = 0 : i64, tpu.core_type = #tpu.core_type<tc>, window_params = [{transform_indices = @transform_0, window_bounds = array<i64: 16, 32>}, {transform_indices = @transform_1, window_bounds = array<i64: 16, 32>}, {pipeline_mode = #tpu.pipeline_mode<synchronous>, transform_indices = @transform_2, window_bounds = array<i64: 32, 32>}, {pipeline_mode = #tpu.pipeline_mode<synchronous>, transform_indices = @transform_3, window_bounds = array<i64: 32, 32>}, {pipeline_mode = #tpu.pipeline_mode<synchronous>, transform_indices = @transform_4, window_bounds = array<i64: 1, 32>}, {pipeline_mode = #tpu.pipeline_mode<synchronous>, transform_indices = @transform_5, window_bounds = array<i64: 1, 32>}, {pipeline_mode = #tpu.pipeline_mode<synchronous>, transform_indices = @transform_6, window_bounds = array<i64: 1, 1>}, {transform_indices = @transform_7, window_bounds = array<i64: 1, 2, 16>}]} {
    %c0 = arith.constant 0 : index
    %c0_0 = arith.constant 0 : index
    %0 = vector.load %arg1[%c0, %c0_0] : memref<16x32xbf16, #tpu.memory_space<vmem>>, vector<16x32xbf16>
    %c0_1 = arith.constant 0 : index
    %c0_2 = arith.constant 0 : index
    %1 = vector.load %arg3[%c0_1, %c0_2] : memref<32x32xbf16, #tpu.memory_space<vmem>>, vector<32x32xbf16>
    %cst = arith.constant dense<0.000000e+00> : vector<16x32xf32>
    %2 = tpu.matmul %0, %1, %cst {dimension_numbers = #tpu.dot_dimension_numbers<[1], [0], [0], [1], [0, 0, 1, 1], [], []>} : vector<16x32xbf16>, vector<32x32xbf16>, vector<16x32xf32> -> vector<16x32xf32>
    %c0_3 = arith.constant 0 : index
    %c0_4 = arith.constant 0 : index
    %3 = vector.load %arg2[%c0_3, %c0_4] : memref<16x32xbf16, #tpu.memory_space<vmem>>, vector<16x32xbf16>
    %c0_5 = arith.constant 0 : index
    %c0_6 = arith.constant 0 : index
    %4 = vector.load %arg4[%c0_5, %c0_6] : memref<32x32xbf16, #tpu.memory_space<vmem>>, vector<32x32xbf16>
    %cst_7 = arith.constant dense<0.000000e+00> : vector<16x32xf32>
    %5 = tpu.matmul %3, %4, %cst_7 {dimension_numbers = #tpu.dot_dimension_numbers<[1], [0], [0], [1], [0, 0, 1, 1], [], []>} : vector<16x32xbf16>, vector<32x32xbf16>, vector<16x32xf32> -> vector<16x32xf32>
    %6 = arith.addf %2, %5 : vector<16x32xf32>
    %c0_8 = arith.constant 0 : index
    %c0_9 = arith.constant 0 : index
    %7 = vector.load %arg5[%c0_8, %c0_9] : memref<1x32xf32, #tpu.memory_space<vmem>>, vector<1x32xf32>
    %8 = vector.broadcast %7 : vector<1x32xf32> to vector<16x32xf32>
    %9 = arith.addf %6, %8 : vector<16x32xf32>
    %10 = math.tanh %9 : vector<16x32xf32>
    %c0_10 = arith.constant 0 : index
    %c0_11 = arith.constant 0 : index
    %11 = vector.load %arg6[%c0_10, %c0_11] : memref<1x32xf32, #tpu.memory_space<vmem>>, vector<1x32xf32>
    %cst_12 = arith.constant dense<0.000000e+00> : vector<1x16xf32>
    %12 = tpu.matmul %11, %10, %cst_12 {dimension_numbers = #tpu.dot_dimension_numbers<[1], [1], [0], [0], [0, 0, 1, 0], [], []>} : vector<1x32xf32>, vector<16x32xf32>, vector<1x16xf32> -> vector<1x16xf32>
    %c0_13 = arith.constant 0 : index
    %c0_14 = arith.constant 0 : index
    %13 = vector.load %arg7[%c0_13, %c0_14] : memref<1x1xf32, #tpu.memory_space<vmem>>, vector<1x1xf32>
    %14 = vector.broadcast %13 : vector<1x1xf32> to vector<1x16xf32>
    %15 = arith.addf %12, %14 : vector<1x16xf32>
    %cst_15 = arith.constant 0.000000e+00 : f32
    %16 = vector.broadcast %cst_15 : f32 to vector<1x16xf32>
    %17 = arith.subf %16, %15 : vector<1x16xf32>
    %18 = tpu.concatenate %15, %17 in 0 : vector<1x16xf32>, vector<1x16xf32> -> vector<2x16xf32>
    %19 = arith.negf %18 : vector<2x16xf32>
    %20 = math.exp %19 : vector<2x16xf32>
    %cst_16 = arith.constant 1.000000e+00 : f32
    %21 = vector.broadcast %cst_16 : f32 to vector<2x16xf32>
    %22 = arith.addf %21, %20 : vector<2x16xf32>
    %23 = arith.divf %21, %22 : vector<2x16xf32>
    %c0_17 = arith.constant 0 : index
    %c0_18 = arith.constant 0 : index
    %c0_19 = arith.constant 0 : index
    %24 = vector.load %arg8[%c0_17, %c0_18, %c0_19] : memref<1x2x16xf32, #tpu.memory_space<vmem>>, vector<1x2x16xf32>
    %25 = vector.shape_cast %24 : vector<1x2x16xf32> to vector<2x16xf32>
    %26 = vector.shape_cast %23 : vector<2x16xf32> to vector<1x2x16xf32>
    tpu.vector_store %arg8[%c0_17, %c0_18, %c0_19], %26 {strides = array<i32>} : memref<1x2x16xf32, #tpu.memory_space<vmem>>, vector<1x2x16xf32>,
    return
  }
  func.func @transform_0(%arg0: i32) -> (i32, i32) {
    %c0_i32 = arith.constant 0 : i32
    %c0_i32_0 = arith.constant 0 : i32
    return %arg0, %c0_i32 : i32, i32
  }
  func.func @transform_1(%arg0: i32) -> (i32, i32) {
    %c0_i32 = arith.constant 0 : i32
    %c0_i32_0 = arith.constant 0 : i32
    return %arg0, %c0_i32 : i32, i32
  }
  func.func @transform_2(%arg0: i32) -> (i32, i32) {
    %c0_i32 = arith.constant 0 : i32
    %c0_i32_0 = arith.constant 0 : i32
    %c0_i32_1 = arith.constant 0 : i32
    return %c0_i32, %c0_i32_0 : i32, i32
  }
  func.func @transform_3(%arg0: i32) -> (i32, i32) {
    %c0_i32 = arith.constant 0 : i32
    %c0_i32_0 = arith.constant 0 : i32
    %c0_i32_1 = arith.constant 0 : i32
    return %c0_i32, %c0_i32_0 : i32, i32
  }
  func.func @transform_4(%arg0: i32) -> (i32, i32) {
    %c0_i32 = arith.constant 0 : i32
    %c0_i32_0 = arith.constant 0 : i32
    %c0_i32_1 = arith.constant 0 : i32
    return %c0_i32, %c0_i32_0 : i32, i32
  }
  func.func @transform_5(%arg0: i32) -> (i32, i32) {
    %c0_i32 = arith.constant 0 : i32
    %c0_i32_0 = arith.constant 0 : i32
    %c0_i32_1 = arith.constant 0 : i32
    return %c0_i32, %c0_i32_0 : i32, i32
  }
  func.func @transform_6(%arg0: i32) -> (i32, i32) {
    %c0_i32 = arith.constant 0 : i32
    %c0_i32_0 = arith.constant 0 : i32
    %c0_i32_1 = arith.constant 0 : i32
    return %c0_i32, %c0_i32_0 : i32, i32
  }
  func.func @transform_7(%arg0: i32) -> (i32, i32, i32) {
    %c0_i32 = arith.constant 0 : i32
    %c0_i32_0 = arith.constant 0 : i32
    %c0_i32_1 = arith.constant 0 : i32
    return %arg0, %c0_i32, %c0_i32_0 : i32, i32, i32
  }
}

</mosaic_0001>

<llo_original>
// kernel: tpu_custom_call.1
$region0: #{tpu_custom_call.1}
  #allocation0 [shape = 'u32[]', space=smem, size = 0x4, offset = 0x4, fixed_abs, tag = 'smem constant byte address 0x4 - core index']
  #allocation1 [shape = 'u32[144,128]{1,0:T(1,128)}', space=vmem, size = 0x12000, scoped, tag = 'internal scratch']
  #allocation2 [shape = 'f32[1,1]{1,0:T(1,128)S(1)}', space=vmem, size = 0x200, scoped, tag = 'scoped memory for tpu_custom_call.1']
  %s0 = inlined_call_operand.hbm [shape: bf16[16,32], index: 0, kind: input, shape index: {}]
  %s1 = inlined_call_operand.hbm [shape: bf16[16,32], index: 1, kind: input, shape index: {}]
  %s2 = inlined_call_operand.hbm [shape: bf16[32,32], index: 2, kind: input, shape index: {}]
  %s3 = inlined_call_operand.hbm [shape: bf16[32,32], index: 3, kind: input, shape index: {}]
  %s4 = inlined_call_operand.vmem [shape: f32[1,32], index: 4, kind: input, shape index: {}]
  %s5 = inlined_call_operand.vmem [shape: f32[1,32], index: 5, kind: input, shape index: {}]
  %s6 = inlined_call_operand.<no memory space> [shape: f32[1,1], index: 6, kind: input, shape index: {}]
  %s7 = inlined_call_operand.hbm [shape: f32[1,2,16], index: 7, kind: output, shape index: {}]
  %s8 = sld [smem:[#allocation0]]
  $region54: #{tpu_custom_call.1} parent=0
    _
  %s10 = ssub.s32 1, %s8
  %s11 = scalar_select 0, %s10, %s8
  %v12 = vstv %s6
  %13 = vst [vmem:[#allocation2] sm:$0x1] %v12
  $region1: #{tpu_custom_call.1} parent=0
    #allocation3 [shape = 'u8[4096]{0}', space=vmem, size = 0x1000, scoped, tag = 'input window, operand 0, single buffered']
    #allocation4 [shape = 's32[1]{0}', space=sflag, size = 0x4, scoped, tag = 'scoped memory for tpu_custom_call.1']
    #allocation5 [shape = 's32[1]{0}', space=sflag, size = 0x4, scoped, tag = 'scoped memory for tpu_custom_call.1']
    #allocation6 [shape = 'u8[4096]{0}', space=vmem, size = 0x1000, scoped, tag = 'input window, operand 1, single buffered']
    #allocation7 [shape = 's32[1]{0}', space=sflag, size = 0x4, scoped, tag = 'scoped memory for tpu_custom_call.1']
    #allocation8 [shape = 'u8[8192]{0}', space=vmem, size = 0x2000, scoped, tag = 'input window, operand 2, single buffered']
    #allocation9 [shape = 'u8[8192]{0}', space=vmem, size = 0x2000, scoped, tag = 'input window, operand 3, single buffered']
    #allocation10 [shape = 's32[1]{0}', space=sflag, size = 0x4, scoped, tag = 'scoped memory for tpu_custom_call.1']
    #allocation11 [shape = 'u8[1024]{0}', space=vmem, size = 0x400, scoped, tag = 'output window, operand 0, single buffered']
    %14 = vsyncpa [#allocation4], 0
    %15 = vsyncpa [#allocation7], 0
    %16 = vsyncpa [#allocation10], 0
    %17 = vsyncpa [#allocation5], 0
    // Predicated region
    $region2: #{tpu_custom_call.1} parent=1 // pred_check
      _
    $region3: #{tpu_custom_call.1} parent=1 // pred_check_branch
      %19 = sbr.rel (0) target = $region5
    $region4: #{tpu_custom_call.1} parent=1 // pred_region
      %s21 = ssub.s32 128, 128
      %22 = vsyncadd [#allocation4], %s21
      %s23 = sshll.u32 [#allocation3], 4
      %s24 = int_to_ptr.vmem [resolvable:$true] %s23
      %29 = dma.hbm_to_vmem [thread:$0]  %s0, 128, %s24, [#allocation4], 64, 64, 4
    $region5: #{tpu_custom_call.1} parent=1 // pred_fallthru
      _
    // Predicated region
    $region6: #{tpu_custom_call.1} parent=1 // pred_check
      _
    $region7: #{tpu_custom_call.1} parent=1 // pred_check_branch
      %31 = sbr.rel (0) target = $region9
    $region8: #{tpu_custom_call.1} parent=1 // pred_region
      %s33 = ssub.s32 128, 128
      %34 = vsyncadd [#allocation7], %s33
      %s35 = sshll.u32 [#allocation6], 4
      %s36 = int_to_ptr.vmem [resolvable:$true] %s35
      %41 = dma.hbm_to_vmem [thread:$0]  %s1, 128, %s36, [#allocation7], 64, 64, 4
    $region9: #{tpu_custom_call.1} parent=1 // pred_fallthru
      _
    // Predicated region
    $region10: #{tpu_custom_call.1} parent=1 // pred_check
      _
    $region11: #{tpu_custom_call.1} parent=1 // pred_check_branch
      %43 = sbr.rel (0) target = $region13
    $region12: #{tpu_custom_call.1} parent=1 // pred_region
      %s45 = ssub.s32 256, 256
      %46 = vsyncadd [#allocation7], %s45
      %s47 = sshll.u32 [#allocation8], 4
      %s48 = int_to_ptr.vmem [resolvable:$true] %s47
      %53 = dma.hbm_to_vmem [thread:$0]  %s2, 256, %s48, [#allocation7], 64, 64, 4
    $region13: #{tpu_custom_call.1} parent=1 // pred_fallthru
      _
    // Predicated region
    $region14: #{tpu_custom_call.1} parent=1 // pred_check
      _
    $region15: #{tpu_custom_call.1} parent=1 // pred_check_branch
      %55 = sbr.rel (0) target = $region17
    $region16: #{tpu_custom_call.1} parent=1 // pred_region
      %s57 = ssub.s32 256, 256
      %58 = vsyncadd [#allocation10], %s57
      %s59 = sshll.u32 [#allocation9], 4
      %s60 = int_to_ptr.vmem [resolvable:$true] %s59
      %65 = dma.hbm_to_vmem [thread:$0]  %s3, 256, %s60, [#allocation10], 64, 64, 4
    $region17: #{tpu_custom_call.1} parent=1 // pred_fallthru
      _
    // Predicated region
    $region18: #{tpu_custom_call.1} parent=1 // pred_check
      _
    $region19: #{tpu_custom_call.1} parent=1 // pred_check_branch
      %67 = sbr.rel (0) target = $region21
    $region20: #{tpu_custom_call.1} parent=1 // pred_region
      _
    $region21: #{tpu_custom_call.1} parent=1 // pred_fallthru
      _
    // Predicated region
    $region22: #{tpu_custom_call.1} parent=1 // pred_check
      _
    $region23: #{tpu_custom_call.1} parent=1 // pred_check_branch
      %69 = sbr.rel (0) target = $region25
    $region24: #{tpu_custom_call.1} parent=1 // pred_region
      _
    $region25: #{tpu_custom_call.1} parent=1 // pred_fallthru
      _
    // Predicated region
    $region26: #{tpu_custom_call.1} parent=1 // pred_check
      _
    $region27: #{tpu_custom_call.1} parent=1 // pred_check_branch
      %71 = sbr.rel (0) target = $region29
    $region28: #{tpu_custom_call.1} parent=1 // pred_region
      _
    $region29: #{tpu_custom_call.1} parent=1 // pred_fallthru
      _
    // Predicated region
    $region30: #{tpu_custom_call.1} parent=1 // pred_check
      _
    $region31: #{tpu_custom_call.1} parent=1 // pred_check_branch
      %73 = sbr.rel (0) target = $region33
    $region32: #{tpu_custom_call.1} parent=1 // pred_region
      %74 = dma.done [#allocation4], 128
    $region33: #{tpu_custom_call.1} parent=1 // pred_fallthru
      _
    // Predicated region
    $region34: #{tpu_custom_call.1} parent=1 // pred_check
      _
    $region35: #{tpu_custom_call.1} parent=1 // pred_check_branch
      %76 = sbr.rel (0) target = $region37
    $region36: #{tpu_custom_call.1} parent=1 // pred_region
      %77 = dma.done [#allocation7], 128
    $region37: #{tpu_custom_call.1} parent=1 // pred_fallthru
      _
    // Predicated region
    $region38: #{tpu_custom_call.1} parent=1 // pred_check
      _
    $region39: #{tpu_custom_call.1} parent=1 // pred_check_branch
      %79 = sbr.rel (0) target = $region41
    $region40: #{tpu_custom_call.1} parent=1 // pred_region
      %80 = dma.done [#allocation7], 256
    $region41: #{tpu_custom_call.1} parent=1 // pred_fallthru
      _
    // Predicated region
    $region42: #{tpu_custom_call.1} parent=1 // pred_check
      _
    $region43: #{tpu_custom_call.1} parent=1 // pred_check_branch
      %82 = sbr.rel (0) target = $region45
    $region44: #{tpu_custom_call.1} parent=1 // pred_region
      %83 = dma.done [#allocation10], 256
    $region45: #{tpu_custom_call.1} parent=1 // pred_fallthru
      _
    %v85 = vld [vmem:[#allocation3] sm:$0xf]
    %v86 = vld [vmem:[#allocation3 + $0x4] sm:$0xf]
    %v87 = vld [vmem:[#allocation8] sm:$0xf]
    %v88 = vld [vmem:[#allocation8 + $0x4] sm:$0xf]
    %v89 = vld [vmem:[#allocation8 + $0x8] sm:$0xf]
    %v90 = vld [vmem:[#allocation8 + $0xc] sm:$0xf]
    %v91 = vld [vmem:[#allocation6] sm:$0xf]
    %v92 = vld [vmem:[#allocation6 + $0x4] sm:$0xf]
    %v93 = vld [vmem:[#allocation9] sm:$0xf]
    %v94 = vld [vmem:[#allocation9 + $0x4] sm:$0xf]
    %v95 = vld [vmem:[#allocation9 + $0x8] sm:$0xf]
    %v96 = vld [vmem:[#allocation9 + $0xc] sm:$0xf]
    %v99 = vunpack.c.l.b16 %v91
    %v100 = vunpack.c.l.b16 %v92
    %v101 = vpack.c.b16 %v100, %v99
    %v106 = vunpack.c.l.b16 %v93
    %v107 = vunpack.c.l.b16 %v94
    %v108 = vunpack.c.l.b16 %v95
    %v109 = vunpack.c.l.b16 %v96
    %v110 = vpack.c.b16 %v107, %v106
    %v111 = vpack.c.b16 %v109, %v108
    %vm114 = vcmask 261120
    %v116 = vsel %vm114, %v101, 0
    %118 = vmatprep.subr.bf16.mxu0 0
    %119 = vmatpush1.bf16.msra.mxu0 %v110
    %120 = vmatprep.subr.bf16.mxu0 0
    %121 = vmatpush1.bf16.msra.mxu0 %v111
    %122 = vmatprep.subr.bf16.mxu0 0
    %123 = vmatpush1.bf16.msra.mxu0 0
    %124 = vmatprep.subr.bf16.mxu0 0
    %125 = vmatpush1.bf16.msra.mxu0 0
    %126 = vmatprep.subr.bf16.mxu0 0
    %127 = vmatpush1.bf16.msra.mxu0 0
    %128 = vmatprep.subr.bf16.mxu0 0
    %129 = vmatpush1.bf16.msra.mxu0 0
    %130 = vmatprep.subr.bf16.mxu0 0
    %131 = vmatpush1.bf16.msra.mxu0 0
    %132 = vmatprep.subr.bf16.mxu0 0
    %133 = vmatpush1.bf16.msra.mxu0 0
    %134 = vmatprep.subr.bf16.mxu0 0
    %135 = vmatpush1.bf16.msra.mxu0 0
    %136 = vmatprep.subr.bf16.mxu0 0
    %137 = vmatpush1.bf16.msra.mxu0 0
    %138 = vmatprep.subr.bf16.mxu0 0
    %139 = vmatpush1.bf16.msra.mxu0 0
    %140 = vmatprep.subr.bf16.mxu0 0
    %141 = vmatpush1.bf16.msra.mxu0 0
    %142 = vmatprep.subr.bf16.mxu0 0
    %143 = vmatpush1.bf16.msra.mxu0 0
    %144 = vmatprep.subr.bf16.mxu0 0
    %145 = vmatpush1.bf16.msra.mxu0 0
    %146 = vmatprep.subr.bf16.mxu0 0
    %147 = vmatpush1.bf16.msra.mxu0 0
    %148 = vmatprep.subr.bf16.mxu0 0
    %149 = vmatpush1.bf16.msra.mxu0 0
    %150 = vmatprep.mubr.bf16.mxu0 0
    %151 = vmatmul.mubr.bf16.gmra.mrb[0].mxu0 %v116
    %v152 = vpop.f32.mrb[0].mxu0
    %v153 = vadd.f32 0.0, %v152
    %v154 = vpop.f32.mrb[0].mxu0
    %v155 = vpop.f32.mrb[0].mxu0
    %v156 = vadd.f32 0.0, %v155
    %v157 = vpop.f32.mrb[0].mxu0
    %158 = vdwg.mxu0
    %v161 = vunpack.c.l.b16 %v85
    %v162 = vunpack.c.l.b16 %v86
    %v163 = vpack.c.b16 %v162, %v161
    %v168 = vunpack.c.l.b16 %v87
    %v169 = vunpack.c.l.b16 %v88
    %v170 = vunpack.c.l.b16 %v89
    %v171 = vunpack.c.l.b16 %v90
    %v172 = vpack.c.b16 %v169, %v168
    %v173 = vpack.c.b16 %v171, %v170
    %v177 = vsel %vm114, %v163, 0
    %179 = vmatprep.subr.bf16.mxu0 0
    %180 = vmatpush1.bf16.msra.mxu0 %v172
    %181 = vmatprep.subr.bf16.mxu0 0
    %182 = vmatpush1.bf16.msra.mxu0 %v173
    %183 = vmatprep.subr.bf16.mxu0 0
    %184 = vmatpush1.bf16.msra.mxu0 0
    %185 = vmatprep.subr.bf16.mxu0 0
    %186 = vmatpush1.bf16.msra.mxu0 0
    %187 = vmatprep.subr.bf16.mxu0 0
    %188 = vmatpush1.bf16.msra.mxu0 0
    %189 = vmatprep.subr.bf16.mxu0 0
    %190 = vmatpush1.bf16.msra.mxu0 0
    %191 = vmatprep.subr.bf16.mxu0 0
    %192 = vmatpush1.bf16.msra.mxu0 0
    %193 = vmatprep.subr.bf16.mxu0 0
    %194 = vmatpush1.bf16.msra.mxu0 0
    %195 = vmatprep.subr.bf16.mxu0 0
    %196 = vmatpush1.bf16.msra.mxu0 0
    %197 = vmatprep.subr.bf16.mxu0 0
    %198 = vmatpush1.bf16.msra.mxu0 0
    %199 = vmatprep.subr.bf16.mxu0 0
    %200 = vmatpush1.bf16.msra.mxu0 0
    %201 = vmatprep.subr.bf16.mxu0 0
    %202 = vmatpush1.bf16.msra.mxu0 0
    %203 = vmatprep.subr.bf16.mxu0 0
    %204 = vmatpush1.bf16.msra.mxu0 0
    %205 = vmatprep.subr.bf16.mxu0 0
    %206 = vmatpush1.bf16.msra.mxu0 0
    %207 = vmatprep.subr.bf16.mxu0 0
    %208 = vmatpush1.bf16.msra.mxu0 0
    %209 = vmatprep.subr.bf16.mxu0 0
    %210 = vmatpush1.bf16.msra.mxu0 0
    %211 = vmatprep.mubr.bf16.mxu0 0
    %212 = vmatmul.mubr.bf16.gmra.mrb[0].mxu0 %v177
    %v213 = vpop.f32.mrb[0].mxu0
    %v214 = vadd.f32 %v153, %v213
    %v215 = vpop.f32.mrb[0].mxu0
    %v216 = vpop.f32.mrb[0].mxu0
    %v217 = vadd.f32 %v156, %v216
    %v218 = vpop.f32.mrb[0].mxu0
    %219 = vdwg.mxu0
    %v220 = vld [vmem:[%s4] sm:$0x1]
    %v222 = vlaneseq
    %v223 = vshrl.u32 %v222, 7
    %v224 = vsub.s32 0, %v223
    %v225 = vrot.slane %v220, %v224
    %v227 = vadd.f32 %v214, %v225
    %v228 = vadd.f32 %v217, %v225
    %v229 = vtanh.pop %v227
    %v230 = vtanh.pop %v228
    %v231 = vld [vmem:[%s5] sm:$0x1]
    %v232 = vld [vmem:[#allocation2] sm:$0x1]
    %234 = vset.pattern.permute.xlu0 0
    %235 = vperm.xlu0 %234, %v232
    %v236 = vpop.permute.xlu0 %235
    %v238 = vlaneseq
    %v239 = vshrl.u32 %v238, 7
    %v240 = vsub.s32 0, %v239
    %v241 = vrot.slane %v236, %v240
    %v243 = vsel %vm114, %v231, 0
    %v246 = vsel %vm114, %v229, 0
    %v249 = vsel %vm114, %v230, 0
    %251 = vmatprep.subr.mxu0 0.0
    %252 = vmatpush1.xpose.msra.mxu0 %v246
    %253 = vmatprep.subr.mxu0 0.0
    %254 = vmatpush1.xpose.msra.mxu0 %v249
    %255 = vmatprep.subr.mxu0 0.0
    %256 = vmatpush1.xpose.msra.mxu0 0.0
    %257 = vmatprep.subr.mxu0 0.0
    %258 = vmatpush1.xpose.msra.mxu0 0.0
    %259 = vmatprep.subr.mxu0 0.0
    %260 = vmatpush1.xpose.msra.mxu0 0.0
    %261 = vmatprep.subr.mxu0 0.0
    %262 = vmatpush1.xpose.msra.mxu0 0.0
    %263 = vmatprep.subr.mxu0 0.0
    %264 = vmatpush1.xpose.msra.mxu0 0.0
    %265 = vmatprep.subr.mxu0 0.0
    %266 = vmatpush1.xpose.msra.mxu0 0.0
    %267 = vmatprep.subr.mxu0 0.0
    %268 = vmatpush1.xpose.msra.mxu0 0.0
    %269 = vmatprep.subr.mxu0 0.0
    %270 = vmatpush1.xpose.msra.mxu0 0.0
    %271 = vmatprep.subr.mxu0 0.0
    %272 = vmatpush1.xpose.msra.mxu0 0.0
    %273 = vmatprep.subr.mxu0 0.0
    %274 = vmatpush1.xpose.msra.mxu0 0.0
    %275 = vmatprep.subr.mxu0 0.0
    %276 = vmatpush1.xpose.msra.mxu0 0.0
    %277 = vmatprep.subr.mxu0 0.0
    %278 = vmatpush1.xpose.msra.mxu0 0.0
    %279 = vmatprep.subr.mxu0 0.0
    %280 = vmatpush1.xpose.msra.mxu0 0.0
    %281 = vmatprep.subr.mxu0 0.0
    %282 = vmatpush1.xpose.msra.mxu0 0.0
    %283 = vmatprep.subr.mxu0 0.0
    %284 = vmatpush1.xpose.msra.mxu0 0.0
    %285 = vmatprep.subr.mxu0 0.0
    %286 = vmatpush1.xpose.msra.mxu0 0.0
    %287 = vmatprep.subr.mxu0 0.0
    %288 = vmatpush1.xpose.msra.mxu0 0.0
    %289 = vmatprep.subr.mxu0 0.0
    %290 = vmatpush1.xpose.msra.mxu0 0.0
    %291 = vmatprep.subr.mxu0 0.0
    %292 = vmatpush1.xpose.msra.mxu0 0.0
    %293 = vmatprep.subr.mxu0 0.0
    %294 = vmatpush1.xpose.msra.mxu0 0.0
    %295 = vmatprep.subr.mxu0 0.0
    %296 = vmatpush1.xpose.msra.mxu0 0.0
    %297 = vmatprep.subr.mxu0 0.0
    %298 = vmatpush1.xpose.msra.mxu0 0.0
    %299 = vmatprep.subr.mxu0 0.0
    %300 = vmatpush1.xpose.msra.mxu0 0.0
    %301 = vmatprep.subr.mxu0 0.0
    %302 = vmatpush1.xpose.msra.mxu0 0.0
    %303 = vmatprep.subr.mxu0 0.0
    %304 = vmatpush1.xpose.msra.mxu0 0.0
    %305 = vmatprep.subr.mxu0 0.0
    %306 = vmatpush1.xpose.msra.mxu0 0.0
    %307 = vmatprep.subr.mxu0 0.0
    %308 = vmatpush1.xpose.msra.mxu0 0.0
    %309 = vmatprep.subr.mxu0 0.0
    %310 = vmatpush1.xpose.msra.mxu0 0.0
    %311 = vmatprep.subr.mxu0 0.0
    %312 = vmatpush1.xpose.msra.mxu0 0.0
    %313 = vmatprep.subr.mxu0 0.0
    %314 = vmatpush1.xpose.msra.mxu0 0.0
    %315 = vmatprep.mubr.f32.mxu0 0.0
    %316 = vmatmul.mubr.f32.gmra.mrb[0].mxu0 %v243
    %v317 = vpop.f32.mrb[0].mxu0
    %v318 = vadd.f32 %v241, %v317
    %v319 = vpop.f32.mrb[0].mxu0
    %320 = vdwg.mxu0
    %v321 = vsub.f32 0.0, %v318
    %v323 = vrot.slane %v321, 7
    %vm325 = vcmask 1040384
    %v326 = vsel %vm325, %v318, %v323
    %v327 = vxor.u32 %v326, 2147483648
    %v328 = vmul.f32 %v327, 1.442695
    %v329 = vpow.pop %v328
    %v330 = vadd.f32 %v329, 1.0
    %v331 = vrcp.pop %v330
    %v332 = vmul.f32 1.0, %v331
    %vm333 = vcmask 123904
    %334 = vst.msk [vmem:[#allocation11] sm:$0x3] %vm333, %v332
    // Predicated region
    $region46: #{tpu_custom_call.1} parent=1 // pred_check
      _
    $region47: #{tpu_custom_call.1} parent=1 // pred_check_branch
      %336 = sbr.rel (0) target = $region49
    $region48: #{tpu_custom_call.1} parent=1 // pred_region
      %s338 = ssub.s32 32, 32
      %339 = vsyncadd [#allocation5], %s338
      %s341 = sshll.u32 [#allocation11], 4
      %s342 = int_to_ptr.vmem [resolvable:$true] %s341
      %344 = dma.vmem_to_hbm [thread:$0]  %s342, 32, %s7, [#allocation5]
    $region49: #{tpu_custom_call.1} parent=1 // pred_fallthru
      _
    // Predicated region
    $region50: #{tpu_custom_call.1} parent=1 // pred_check
      _
    $region51: #{tpu_custom_call.1} parent=1 // pred_check_branch
      %346 = sbr.rel (0) target = $region53
    $region52: #{tpu_custom_call.1} parent=1 // pred_region
      %347 = dma.done [#allocation5], 32
    $region53: #{tpu_custom_call.1} parent=1 // pred_fallthru
      _
    %348 = vsyncpa [#allocation4], 1
    %349 = vsyncpa [#allocation7], 1
    %350 = vsyncpa [#allocation10], 1
    %351 = vsyncpa [#allocation5], 1

</llo_original>
